<compile_context>
chip_gen: v6e
topology: v6e:2x2x1
jax: 0.10.0
libtpu: 0.0.40
codegen_flags: <defaults>
</compile_context>

<pallas_src>
import functools

import numpy as np
import jax
import jax.numpy as jnp
from jax.experimental import pallas as pl
from jax.experimental.pallas import tpu as pltpu

# ---- model hyperparameters (match KANLayer.__init__) ----
IN_DIM = 6
OUT_DIM = 32
NUM_BASIS = 10
DOMAIN_MIN, DOMAIN_MAX = -1.0, 1.0
WIDTH = (DOMAIN_MAX - DOMAIN_MIN) / (NUM_BASIS - 1) if NUM_BASIS > 1 else 1.0


def _round_up(n, m):
    return ((n + m - 1) // m) * m


def kan_kernel(x_ref, expand_t_ref, offs_ref, w_ref, b_ref, o_ref, *,
               dom_min, dom_max):
    # x_ref:        (tile, in_dim)      raw input rows
    # expand_t_ref: (in_dim, in_dim*nb) column-expansion matrix, pre-scaled by 1/width
    # offs_ref:     (1, in_dim*nb)      -centers/width, tiled per input dim
    # w_ref:        (in_dim*nb, out_dim) fused weight matrix
    # b_ref:        (1, out_dim)        bias row
    # o_ref:        (tile, out_dim)     output rows
    xc = jnp.clip(x_ref[...], dom_min, dom_max)                       # (tile, in)

    # z[b, i*nb + k] = (x[b, i] - centers[k]) / width, via one tiny MXU matmul
    # (K = in_dim) plus a sublane-broadcast add.  No reshapes / repeats needed.
    z = jnp.dot(xc, expand_t_ref[...],
                preferred_element_type=jnp.float32) + offs_ref[...]   # (tile, nk)

    # Triangular B-spline basis.
    basis = jnp.maximum(1.0 - jnp.abs(z), 0.0)                        # (tile, nk)

    # Single fused matmul over K = in_dim * num_basis, bias folded in.
    o_ref[...] = (jnp.dot(basis, w_ref[...],
                          preferred_element_type=jnp.float32) + b_ref[...])


def _choose_tile(batch, tb):
    """Batch tile: multiple of 8, as large as requested, but >=2 grid steps when
    there is enough work (so both v7x TensorCores get used)."""
    pb = _round_up(batch, 8)
    tile = min(_round_up(tb, 8), pb)
    if pb >= 256 and pl.cdiv(pb, tile) < 2:
        tile = _round_up((pb + 1) // 2, 8)
    return tile


@functools.partial(jax.jit, static_argnames=("tb",))
def kan_layer_forward(x, centers, weights, bias, *, tb=8192):
    """x: (batch, in_dim) f32. weights: (num_basis, in_dim, out_dim) as in PyTorch.

    Returns (batch, out_dim) f32, matching KANLayer.forward.
    """
    batch, in_dim = x.shape
    num_basis, _, out_dim = weights.shape
    nk = in_dim * num_basis
    inv_width = np.float32(1.0 / WIDTH)

    tile = _choose_tile(batch, tb)
    grid = pl.cdiv(batch, tile)

    # --- tiny, trace-time parameter repacking (constant-folds / fuses under jit) ---
    # E^T[i, i*nb + k] = 1/width  (numpy -> compile-time constant)
    expand_t = (np.repeat(np.eye(in_dim, dtype=np.float32), num_basis, axis=0).T
                * inv_width)                                          # (in, nk)
    offs = (-(jnp.tile(centers.astype(jnp.float32), in_dim)) * inv_width
            ).reshape(1, nk)                                          # (1, nk)
    # W2[i*nb + k, o] = weights[k, i, o]
    w2 = jnp.transpose(weights.astype(jnp.float32), (1, 0, 2)).reshape(nk, out_dim)
    bias_row = bias.astype(jnp.float32).reshape(1, out_dim)

    kernel = functools.partial(kan_kernel, dom_min=DOMAIN_MIN, dom_max=DOMAIN_MAX)

    return pl.pallas_call(
        kernel,
        out_shape=jax.ShapeDtypeStruct((batch, out_dim), jnp.float32),
        grid_spec=pltpu.PrefetchScalarGridSpec(
            num_scalar_prefetch=0,
            grid=(grid,),
            in_specs=[
                pl.BlockSpec((tile, in_dim), lambda b: (b, 0)),     # x rows
                pl.BlockSpec((in_dim, nk), lambda b: (0, 0)),       # expansion
                pl.BlockSpec((1, nk), lambda b: (0, 0)),            # -centers/width
                pl.BlockSpec((nk, out_dim), lambda b: (0, 0)),      # fused weights
                pl.BlockSpec((1, out_dim), lambda b: (0, 0)),       # bias
            ],
            out_specs=pl.BlockSpec((tile, out_dim), lambda b: (b, 0)),
        ),
        compiler_params=pltpu.CompilerParams(
            dimension_semantics=("parallel",)),
    )(x.astype(jnp.float32), expand_t, offs, w2, bias_row)


def kan_layer_reference(x, centers, weights, bias):
    """Pure-JAX reference matching the PyTorch forward exactly."""
    xc = jnp.clip(x, DOMAIN_MIN, DOMAIN_MAX)                          # (B, in)
    z = (xc[:, :, None] - centers[None, None, :]) / WIDTH             # (B, in, nb)
    basis = jnp.maximum(1.0 - jnp.abs(z), 0.0)                        # (B, in, nb)
    out = jnp.einsum('bik,kio->bo', basis, weights,
                     precision=jax.lax.Precision.HIGHEST) + bias[None, :]
    return out


if __name__ == "__main__":
    key = jax.random.PRNGKey(0)
    kx, kw = jax.random.split(key)

    # deterministic parameter init (shapes from KANLayer.__init__)
    centers = jnp.linspace(DOMAIN_MIN, DOMAIN_MAX, NUM_BASIS).astype(jnp.float32)
    weights = jax.random.uniform(
        kw, (NUM_BASIS, IN_DIM, OUT_DIM), minval=-0.1, maxval=0.1,
        dtype=jnp.float32)
    bias = jnp.zeros((OUT_DIM,), dtype=jnp.float32)

    # module's batch_size (128), a non-multiple-of-8 batch (ragged last block),
    # and a batch large enough to exercise a 2-step grid with a ragged tail.
    for batch in (128, 100, 300):
        kb = jax.random.fold_in(kx, batch)
        x = jax.random.normal(kb, (batch, IN_DIM), dtype=jnp.float32)

        out = jax.block_until_ready(
            kan_layer_forward(x, centers, weights, bias, tb=8192))
        ref = kan_layer_reference(x, centers, weights, bias)

        assert out.shape == (batch, OUT_DIM)
        assert jnp.allclose(out, ref, atol=1e-4, rtol=1e-4), (
            f"batch={batch} max abs diff = {jnp.max(jnp.abs(out - ref))}")

    print("KERNEL_OK")
</pallas_src>

<mosaic_0001>
module attributes {stable_mosaic.version = 11 : i64} {
  func.func @kan_kernel(%arg0: i32, %arg1: memref<128x6xf32, #tpu.memory_space<vmem>>, %arg2: memref<6x60xf32, #tpu.memory_space<vmem>>, %arg3: memref<1x60xf32, #tpu.memory_space<vmem>>, %arg4: memref<60x32xf32, #tpu.memory_space<vmem>>, %arg5: memref<1x32xf32, #tpu.memory_space<vmem>>, %arg6: memref<128x32xf32, #tpu.memory_space<vmem>>) attributes {dimension_semantics = [#tpu.dimension_semantics<parallel>], iteration_bounds = array<i64: 1>, scalar_prefetch = 0 : i64, scratch_operands = 0 : i64, tpu.core_type = #tpu.core_type<tc>, window_params = [{transform_indices = @transform_0, window_bounds = array<i64: 128, 6>}, {pipeline_mode = #tpu.pipeline_mode<synchronous>, transform_indices = @transform_1, window_bounds = array<i64: 6, 60>}, {pipeline_mode = #tpu.pipeline_mode<synchronous>, transform_indices = @transform_2, window_bounds = array<i64: 1, 60>}, {pipeline_mode = #tpu.pipeline_mode<synchronous>, transform_indices = @transform_3, window_bounds = array<i64: 60, 32>}, {pipeline_mode = #tpu.pipeline_mode<synchronous>, transform_indices = @transform_4, window_bounds = array<i64: 1, 32>}, {transform_indices = @transform_5, window_bounds = array<i64: 128, 32>}]} {
    %c0 = arith.constant 0 : index
    %c0_0 = arith.constant 0 : index
    %0 = vector.load %arg1[%c0, %c0_0] : memref<128x6xf32, #tpu.memory_space<vmem>>, vector<128x6xf32>
    %cst = arith.constant -1.000000e+00 : f32
    %cst_1 = arith.constant 1.000000e+00 : f32
    %1 = vector.broadcast %cst : f32 to vector<128x6xf32>
    %2 = arith.maximumf %1, %0 : vector<128x6xf32>
    %3 = vector.broadcast %cst_1 : f32 to vector<128x6xf32>
    %4 = arith.minimumf %3, %2 : vector<128x6xf32>
    %c0_2 = arith.constant 0 : index
    %c0_3 = arith.constant 0 : index
    %5 = vector.load %arg2[%c0_2, %c0_3] : memref<6x60xf32, #tpu.memory_space<vmem>>, vector<6x60xf32>
    %cst_4 = arith.constant dense<0.000000e+00> : vector<128x60xf32>
    %6 = tpu.matmul %4, %5, %cst_4 {dimension_numbers = #tpu.dot_dimension_numbers<[1], [0], [0], [1], [0, 0, 1, 1], [], []>} : vector<128x6xf32>, vector<6x60xf32>, vector<128x60xf32> -> vector<128x60xf32>
    %c0_5 = arith.constant 0 : index
    %c0_6 = arith.constant 0 : index
    %7 = vector.load %arg3[%c0_5, %c0_6] : memref<1x60xf32, #tpu.memory_space<vmem>>, vector<1x60xf32>
    %8 = vector.broadcast %7 : vector<1x60xf32> to vector<128x60xf32>
    %9 = arith.addf %6, %8 : vector<128x60xf32>
    %10 = math.absf %9 : vector<128x60xf32>
    %cst_7 = arith.constant 1.000000e+00 : f32
    %11 = vector.broadcast %cst_7 : f32 to vector<128x60xf32>
    %12 = arith.subf %11, %10 : vector<128x60xf32>
    %cst_8 = arith.constant 0.000000e+00 : f32
    %13 = vector.broadcast %cst_8 : f32 to vector<128x60xf32>
    %14 = arith.maximumf %12, %13 : vector<128x60xf32>
    %c0_9 = arith.constant 0 : index
    %c0_10 = arith.constant 0 : index
    %15 = vector.load %arg4[%c0_9, %c0_10] : memref<60x32xf32, #tpu.memory_space<vmem>>, vector<60x32xf32>
    %cst_11 = arith.constant dense<0.000000e+00> : vector<128x32xf32>
    %16 = tpu.matmul %14, %15, %cst_11 {dimension_numbers = #tpu.dot_dimension_numbers<[1], [0], [0], [1], [0, 0, 1, 1], [], []>} : vector<128x60xf32>, vector<60x32xf32>, vector<128x32xf32> -> vector<128x32xf32>
    %c0_12 = arith.constant 0 : index
    %c0_13 = arith.constant 0 : index
    %17 = vector.load %arg5[%c0_12, %c0_13] : memref<1x32xf32, #tpu.memory_space<vmem>>, vector<1x32xf32>
    %18 = vector.broadcast %17 : vector<1x32xf32> to vector<128x32xf32>
    %19 = arith.addf %16, %18 : vector<128x32xf32>
    %c0_14 = arith.constant 0 : index
    %c0_15 = arith.constant 0 : index
    %20 = vector.load %arg6[%c0_14, %c0_15] : memref<128x32xf32, #tpu.memory_space<vmem>>, vector<128x32xf32>
    tpu.vector_store %arg6[%c0_14, %c0_15], %19 {strides = array<i32>} : memref<128x32xf32, #tpu.memory_space<vmem>>, vector<128x32xf32>,
    return
  }
  func.func @transform_0(%arg0: i32) -> (i32, i32) {
    %c0_i32 = arith.constant 0 : i32
    %c0_i32_0 = arith.constant 0 : i32
    return %arg0, %c0_i32 : i32, i32
  }
  func.func @transform_1(%arg0: i32) -> (i32, i32) {
    %c0_i32 = arith.constant 0 : i32
    %c0_i32_0 = arith.constant 0 : i32
    %c0_i32_1 = arith.constant 0 : i32
    return %c0_i32, %c0_i32_0 : i32, i32
  }
  func.func @transform_2(%arg0: i32) -> (i32, i32) {
    %c0_i32 = arith.constant 0 : i32
    %c0_i32_0 = arith.constant 0 : i32
    %c0_i32_1 = arith.constant 0 : i32
    return %c0_i32, %c0_i32_0 : i32, i32
  }
  func.func @transform_3(%arg0: i32) -> (i32, i32) {
    %c0_i32 = arith.constant 0 : i32
    %c0_i32_0 = arith.constant 0 : i32
    %c0_i32_1 = arith.constant 0 : i32
    return %c0_i32, %c0_i32_0 : i32, i32
  }
  func.func @transform_4(%arg0: i32) -> (i32, i32) {
    %c0_i32 = arith.constant 0 : i32
    %c0_i32_0 = arith.constant 0 : i32
    %c0_i32_1 = arith.constant 0 : i32
    return %c0_i32, %c0_i32_0 : i32, i32
  }
  func.func @transform_5(%arg0: i32) -> (i32, i32) {
    %c0_i32 = arith.constant 0 : i32
    %c0_i32_0 = arith.constant 0 : i32
    return %arg0, %c0_i32 : i32, i32
  }
}

</mosaic_0001>

<llo_original>
// kernel: kan_layer_forward.1
$region0: #{kan_layer_forward.1}
  #allocation0 [shape = 'u32[]', space=smem, size = 0x4, offset = 0x4, fixed_abs, tag = 'smem constant byte address 0x4 - core index']
  #allocation1 [shape = 'u32[144,128]{1,0:T(1,128)}', space=vmem, size = 0x12000, scoped, tag = 'internal scratch']
  %s0 = inlined_call_operand.vmem [shape: f32[128,6], index: 0, kind: input, shape index: {}]
  %s1 = inlined_call_operand.vmem [shape: f32[6,60], index: 1, kind: input, shape index: {}]
  %s2 = inlined_call_operand.vmem [shape: f32[1,60], index: 2, kind: input, shape index: {}]
  %s3 = inlined_call_operand.vmem [shape: f32[60,32], index: 3, kind: input, shape index: {}]
  %s4 = inlined_call_operand.vmem [shape: f32[1,32], index: 4, kind: input, shape index: {}]
  %s5 = inlined_call_operand.vmem [shape: f32[128,32], index: 5, kind: output, shape index: {}]
  %s6 = sld [smem:[#allocation0]]
  $region30: #{kan_layer_forward.1} parent=0
    _
  %s8 = ssub.s32 1, %s6
  %s9 = scalar_select 0, %s8, %s6
  // Predicated region
  $region2: #{kan_layer_forward.1} parent=0 // pred_check
    _
  $region3: #{kan_layer_forward.1} parent=0 // pred_check_branch
    %11 = sbr.rel (0) target = $region5
  $region4: #{kan_layer_forward.1} parent=0 // pred_region
    _
  $region5: #{kan_layer_forward.1} parent=0 // pred_fallthru
    _
  // Predicated region
  $region6: #{kan_layer_forward.1} parent=0 // pred_check
    _
  $region7: #{kan_layer_forward.1} parent=0 // pred_check_branch
    %13 = sbr.rel (0) target = $region9
  $region8: #{kan_layer_forward.1} parent=0 // pred_region
    _
  $region9: #{kan_layer_forward.1} parent=0 // pred_fallthru
    _
  // Predicated region
  $region10: #{kan_layer_forward.1} parent=0 // pred_check
    _
  $region11: #{kan_layer_forward.1} parent=0 // pred_check_branch
    %15 = sbr.rel (0) target = $region13
  $region12: #{kan_layer_forward.1} parent=0 // pred_region
    _
  $region13: #{kan_layer_forward.1} parent=0 // pred_fallthru
    _
  // Predicated region
  $region14: #{kan_layer_forward.1} parent=0 // pred_check
    _
  $region15: #{kan_layer_forward.1} parent=0 // pred_check_branch
    %17 = sbr.rel (0) target = $region17
  $region16: #{kan_layer_forward.1} parent=0 // pred_region
    _
  $region17: #{kan_layer_forward.1} parent=0 // pred_fallthru
    _
  // Predicated region
  $region18: #{kan_layer_forward.1} parent=0 // pred_check
    _
  $region19: #{kan_layer_forward.1} parent=0 // pred_check_branch
    %19 = sbr.rel (0) target = $region21
  $region20: #{kan_layer_forward.1} parent=0 // pred_region
    _
  $region21: #{kan_layer_forward.1} parent=0 // pred_fallthru
    _
  %v20 = vld [vmem:[%s0] sm:$0xff]
  %v21 = vld [vmem:[%s0 + $0x8] sm:$0xff]
  %v22 = vld [vmem:[%s0 + $0x10] sm:$0xff]
  %v23 = vld [vmem:[%s0 + $0x18] sm:$0xff]
  %v24 = vld [vmem:[%s0 + $0x20] sm:$0xff]
  %v25 = vld [vmem:[%s0 + $0x28] sm:$0xff]
  %v26 = vld [vmem:[%s0 + $0x30] sm:$0xff]
  %v27 = vld [vmem:[%s0 + $0x38] sm:$0xff]
  %v28 = vld [vmem:[%s0 + $0x40] sm:$0xff]
  %v29 = vld [vmem:[%s0 + $0x48] sm:$0xff]
  %v30 = vld [vmem:[%s0 + $0x50] sm:$0xff]
  %v31 = vld [vmem:[%s0 + $0x58] sm:$0xff]
  %v32 = vld [vmem:[%s0 + $0x60] sm:$0xff]
  %v33 = vld [vmem:[%s0 + $0x68] sm:$0xff]
  %v34 = vld [vmem:[%s0 + $0x70] sm:$0xff]
  %v35 = vld [vmem:[%s0 + $0x78] sm:$0xff]
  %v36 = vmax.f32 %v20, -1.0
  %v37 = vmax.f32 %v21, -1.0
  %v38 = vmax.f32 %v22, -1.0
  %v39 = vmax.f32 %v23, -1.0
  %v40 = vmax.f32 %v24, -1.0
  %v41 = vmax.f32 %v25, -1.0
  %v42 = vmax.f32 %v26, -1.0
  %v43 = vmax.f32 %v27, -1.0
  %v44 = vmax.f32 %v28, -1.0
  %v45 = vmax.f32 %v29, -1.0
  %v46 = vmax.f32 %v30, -1.0
  %v47 = vmax.f32 %v31, -1.0
  %v48 = vmax.f32 %v32, -1.0
  %v49 = vmax.f32 %v33, -1.0
  %v50 = vmax.f32 %v34, -1.0
  %v51 = vmax.f32 %v35, -1.0
  %v52 = vmin.f32 %v36, 1.0
  %v53 = vmin.f32 %v37, 1.0
  %v54 = vmin.f32 %v38, 1.0
  %v55 = vmin.f32 %v39, 1.0
  %v56 = vmin.f32 %v40, 1.0
  %v57 = vmin.f32 %v41, 1.0
  %v58 = vmin.f32 %v42, 1.0
  %v59 = vmin.f32 %v43, 1.0
  %v60 = vmin.f32 %v44, 1.0
  %v61 = vmin.f32 %v45, 1.0
  %v62 = vmin.f32 %v46, 1.0
  %v63 = vmin.f32 %v47, 1.0
  %v64 = vmin.f32 %v48, 1.0
  %v65 = vmin.f32 %v49, 1.0
  %v66 = vmin.f32 %v50, 1.0
  %v67 = vmin.f32 %v51, 1.0
  %v68 = vld [vmem:[%s1] sm:$0x3f]
  %v69 = vld [vmem:[%s2] sm:$0x1]
  %v71 = vlaneseq
  %v72 = vshrl.u32 %v71, 7
  %v73 = vsub.s32 0, %v72
  %v74 = vrot.slane %v69, %v73
  %vm76 = vcmask 48128
  %v78 = vsel %vm76, %v52, 0
  %v81 = vsel %vm76, %v53, 0
  %v84 = vsel %vm76, %v54, 0
  %v87 = vsel %vm76, %v55, 0
  %v90 = vsel %vm76, %v56, 0
  %v93 = vsel %vm76, %v57, 0
  %v96 = vsel %vm76, %v58, 0
  %v99 = vsel %vm76, %v59, 0
  %v102 = vsel %vm76, %v60, 0
  %v105 = vsel %vm76, %v61, 0
  %v108 = vsel %vm76, %v62, 0
  %v111 = vsel %vm76, %v63, 0
  %v114 = vsel %vm76, %v64, 0
  %v117 = vsel %vm76, %v65, 0
  %v120 = vsel %vm76, %v66, 0
  %v123 = vsel %vm76, %v67, 0
  %vm125 = vcmask 1045504
  %v127 = vsel %vm125, %v68, 0
  %129 = vmatprep.subr.mxu0 0.0
  %130 = vmatpush1.msra.mxu0 0.0
  %131 = vmatprep.subr.mxu0 0.0
  %132 = vmatpush1.msra.mxu0 0.0
  %133 = vmatprep.subr.mxu0 0.0
  %134 = vmatpush1.msra.mxu0 0.0
  %135 = vmatprep.subr.mxu0 0.0
  %136 = vmatpush1.msra.mxu0 0.0
  %137 = vmatprep.subr.mxu0 0.0
  %138 = vmatpush1.msra.mxu0 0.0
  %139 = vmatprep.subr.mxu0 0.0
  %140 = vmatpush1.msra.mxu0 0.0
  %141 = vmatprep.subr.mxu0 0.0
  %142 = vmatpush1.msra.mxu0 0.0
  %143 = vmatprep.subr.mxu0 0.0
  %144 = vmatpush1.msra.mxu0 0.0
  %145 = vmatprep.subr.mxu0 0.0
  %146 = vmatpush1.msra.mxu0 0.0
  %147 = vmatprep.subr.mxu0 0.0
  %148 = vmatpush1.msra.mxu0 0.0
  %149 = vmatprep.subr.mxu0 0.0
  %150 = vmatpush1.msra.mxu0 0.0
  %151 = vmatprep.subr.mxu0 0.0
  %152 = vmatpush1.msra.mxu0 0.0
  %153 = vmatprep.subr.mxu0 0.0
  %154 = vmatpush1.msra.mxu0 0.0
  %155 = vmatprep.subr.mxu0 0.0
  %156 = vmatpush1.msra.mxu0 0.0
  %157 = vmatprep.subr.mxu0 0.0
  %158 = vmatpush1.msra.mxu0 0.0
  %159 = vmatprep.subr.mxu0 0.0
  %160 = vmatpush1.msra.mxu0 %v127
  %161 = vmatprep.subr.mxu0 0.0
  %162 = vmatpush2.msra.mxu0 0.0
  %163 = vmatprep.subr.mxu0 0.0
  %164 = vmatpush2.msra.mxu0 0.0
  %165 = vmatprep.subr.mxu0 0.0
  %166 = vmatpush2.msra.mxu0 0.0
  %167 = vmatprep.subr.mxu0 0.0
  %168 = vmatpush2.msra.mxu0 0.0
  %169 = vmatprep.subr.mxu0 0.0
  %170 = vmatpush2.msra.mxu0 0.0
  %171 = vmatprep.subr.mxu0 0.0
  %172 = vmatpush2.msra.mxu0 0.0
  %173 = vmatprep.subr.mxu0 0.0
  %174 = vmatpush2.msra.mxu0 0.0
  %175 = vmatprep.subr.mxu0 0.0
  %176 = vmatpush2.msra.mxu0 0.0
  %177 = vmatprep.subr.mxu0 0.0
  %178 = vmatpush2.msra.mxu0 0.0
  %179 = vmatprep.subr.mxu0 0.0
  %180 = vmatpush2.msra.mxu0 0.0
  %181 = vmatprep.subr.mxu0 0.0
  %182 = vmatpush2.msra.mxu0 0.0
  %183 = vmatprep.subr.mxu0 0.0
  %184 = vmatpush2.msra.mxu0 0.0
  %185 = vmatprep.subr.mxu0 0.0
  %186 = vmatpush2.msra.mxu0 0.0
  %187 = vmatprep.subr.mxu0 0.0
  %188 = vmatpush2.msra.mxu0 0.0
  %189 = vmatprep.subr.mxu0 0.0
  %190 = vmatpush2.msra.mxu0 0.0
  %191 = vmatprep.subr.mxu0 0.0
  %192 = vmatpush2.msra.mxu0 0.0
  %193 = vmatprep.mubr.f32.mxu0 0.0
  %194 = vmatmul.mubr.f32.gmra.mxu0 %v78
  %v195 = vpop.f32.mrf.mxu0
  %v196 = vadd.f32 %v74, %v195
  %v197 = vpop.f32.mrf.mxu0
  %198 = vmatprep.mubr.f32.mxu0 0.0
  %199 = vmatmul.mubr.f32.gmra.mxu0 %v81
  %v200 = vpop.f32.mrf.mxu0
  %v201 = vadd.f32 %v74, %v200
  %v202 = vpop.f32.mrf.mxu0
  %203 = vmatprep.mubr.f32.mxu0 0.0
  %204 = vmatmul.mubr.f32.gmra.mxu0 %v84
  %v205 = vpop.f32.mrf.mxu0
  %v206 = vadd.f32 %v74, %v205
  %v207 = vpop.f32.mrf.mxu0
  %208 = vmatprep.mubr.f32.mxu0 0.0
  %209 = vmatmul.mubr.f32.gmra.mxu0 %v87
  %v210 = vpop.f32.mrf.mxu0
  %v211 = vadd.f32 %v74, %v210
  %v212 = vpop.f32.mrf.mxu0
  %213 = vmatprep.mubr.f32.mxu0 0.0
  %214 = vmatmul.mubr.f32.gmra.mxu0 %v90
  %v215 = vpop.f32.mrf.mxu0
  %v216 = vadd.f32 %v74, %v215
  %v217 = vpop.f32.mrf.mxu0
  %218 = vmatprep.mubr.f32.mxu0 0.0
  %219 = vmatmul.mubr.f32.gmra.mxu0 %v93
  %v220 = vpop.f32.mrf.mxu0
  %v221 = vadd.f32 %v74, %v220
  %v222 = vpop.f32.mrf.mxu0
  %223 = vmatprep.mubr.f32.mxu0 0.0
  %224 = vmatmul.mubr.f32.gmra.mxu0 %v96
  %v225 = vpop.f32.mrf.mxu0
  %v226 = vadd.f32 %v74, %v225
  %v227 = vpop.f32.mrf.mxu0
  %228 = vmatprep.mubr.f32.mxu0 0.0
  %229 = vmatmul.mubr.f32.gmra.mxu0 %v99
  %v230 = vpop.f32.mrf.mxu0
  %v231 = vadd.f32 %v74, %v230
  %v232 = vpop.f32.mrf.mxu0
  %233 = vmatprep.mubr.f32.mxu0 0.0
  %234 = vmatmul.mubr.f32.gmra.mxu0 %v102
  %v235 = vpop.f32.mrf.mxu0
  %v236 = vadd.f32 %v74, %v235
  %v237 = vpop.f32.mrf.mxu0
  %238 = vmatprep.mubr.f32.mxu0 0.0
  %239 = vmatmul.mubr.f32.gmra.mxu0 %v105
  %v240 = vpop.f32.mrf.mxu0
  %v241 = vadd.f32 %v74, %v240
  %v242 = vpop.f32.mrf.mxu0
  %243 = vmatprep.mubr.f32.mxu0 0.0
  %244 = vmatmul.mubr.f32.gmra.mxu0 %v108
  %v245 = vpop.f32.mrf.mxu0
  %v246 = vadd.f32 %v74, %v245
  %v247 = vpop.f32.mrf.mxu0
  %248 = vmatprep.mubr.f32.mxu0 0.0
  %249 = vmatmul.mubr.f32.gmra.mxu0 %v111
  %v250 = vpop.f32.mrf.mxu0
  %v251 = vadd.f32 %v74, %v250
  %v252 = vpop.f32.mrf.mxu0
  %253 = vmatprep.mubr.f32.mxu0 0.0
  %254 = vmatmul.mubr.f32.gmra.mxu0 %v114
  %v255 = vpop.f32.mrf.mxu0
  %v256 = vadd.f32 %v74, %v255
  %v257 = vpop.f32.mrf.mxu0
  %258 = vmatprep.mubr.f32.mxu0 0.0
  %259 = vmatmul.mubr.f32.gmra.mxu0 %v117
  %v260 = vpop.f32.mrf.mxu0
  %v261 = vadd.f32 %v74, %v260
  %v262 = vpop.f32.mrf.mxu0
  %263 = vmatprep.mubr.f32.mxu0 0.0
  %264 = vmatmul.mubr.f32.gmra.mxu0 %v120
  %v265 = vpop.f32.mrf.mxu0
  %v266 = vadd.f32 %v74, %v265
  %v267 = vpop.f32.mrf.mxu0
  %268 = vmatprep.mubr.f32.mxu0 0.0
  %269 = vmatmul.mubr.f32.gmra.mxu0 %v123
  %v270 = vpop.f32.mrf.mxu0
  %v271 = vadd.f32 %v74, %v270
  %v272 = vpop.f32.mrf.mxu0
  %273 = vdwg.mxu0
  %v274 = vand.u32 2147483647, %v196
  %v275 = vand.u32 2147483647, %v201
  %v276 = vand.u32 2147483647, %v206
  %v277 = vand.u32 2147483647, %v211
  %v278 = vand.u32 2147483647, %v216
  %v279 = vand.u32 2147483647, %v221
  %v280 = vand.u32 2147483647, %v226
  %v281 = vand.u32 2147483647, %v231
  %v282 = vand.u32 2147483647, %v236
  %v283 = vand.u32 2147483647, %v241
  %v284 = vand.u32 2147483647, %v246
  %v285 = vand.u32 2147483647, %v251
  %v286 = vand.u32 2147483647, %v256
  %v287 = vand.u32 2147483647, %v261
  %v288 = vand.u32 2147483647, %v266
  %v289 = vand.u32 2147483647, %v271
  %v290 = vsub.f32 1.0, %v274
  %v291 = vsub.f32 1.0, %v275
  %v292 = vsub.f32 1.0, %v276
  %v293 = vsub.f32 1.0, %v277
  %v294 = vsub.f32 1.0, %v278
  %v295 = vsub.f32 1.0, %v279
  %v296 = vsub.f32 1.0, %v280
  %v297 = vsub.f32 1.0, %v281
  %v298 = vsub.f32 1.0, %v282
  %v299 = vsub.f32 1.0, %v283
  %v300 = vsub.f32 1.0, %v284
  %v301 = vsub.f32 1.0, %v285
  %v302 = vsub.f32 1.0, %v286
  %v303 = vsub.f32 1.0, %v287
  %v304 = vsub.f32 1.0, %v288
  %v305 = vsub.f32 1.0, %v289
  %v306 = vmax.f32 %v290, 0.0
  %v307 = vmax.f32 %v291, 0.0
  %v308 = vmax.f32 %v292, 0.0
  %v309 = vmax.f32 %v293, 0.0
  %v310 = vmax.f32 %v294, 0.0
  %v311 = vmax.f32 %v295, 0.0
  %v312 = vmax.f32 %v296, 0.0
  %v313 = vmax.f32 %v297, 0.0
  %v314 = vmax.f32 %v298, 0.0
  %v315 = vmax.f32 %v299, 0.0
  %v316 = vmax.f32 %v300, 0.0
  %v317 = vmax.f32 %v301, 0.0
  %v318 = vmax.f32 %v302, 0.0
  %v319 = vmax.f32 %v303, 0.0
  %v320 = vmax.f32 %v304, 0.0
  %v321 = vmax.f32 %v305, 0.0
  %v322 = vld [vmem:[%s3] sm:$0xff]
  %v323 = vld [vmem:[%s3 + $0x8] sm:$0xff]
  %v324 = vld [vmem:[%s3 + $0x10] sm:$0xff]
  %v325 = vld [vmem:[%s3 + $0x18] sm:$0xff]
  %v326 = vld [vmem:[%s3 + $0x20] sm:$0xff]
  %v327 = vld [vmem:[%s3 + $0x28] sm:$0xff]
  %v328 = vld [vmem:[%s3 + $0x30] sm:$0xff]
  %v329 = vld [vmem:[%s3 + $0x38] sm:$0xf]
  %v330 = vld [vmem:[%s4] sm:$0x1]
  %v332 = vlaneseq
  %v333 = vshrl.u32 %v332, 7
  %v334 = vsub.s32 0, %v333
  %v335 = vrot.slane %v330, %v334
  %vm337 = vcmask 490496
  %v339 = vsel %vm337, %v306, 0
  %v342 = vsel %vm337, %v307, 0
  %v345 = vsel %vm337, %v308, 0
  %v348 = vsel %vm337, %v309, 0
  %v351 = vsel %vm337, %v310, 0
  %v354 = vsel %vm337, %v311, 0
  %v357 = vsel %vm337, %v312, 0
  %v360 = vsel %vm337, %v313, 0
  %v363 = vsel %vm337, %v314, 0
  %v366 = vsel %vm337, %v315, 0
  %v369 = vsel %vm337, %v316, 0
  %v372 = vsel %vm337, %v317, 0
  %v375 = vsel %vm337, %v318, 0
  %v378 = vsel %vm337, %v319, 0
  %v381 = vsel %vm337, %v320, 0
  %v384 = vsel %vm337, %v321, 0
  %vm386 = vcmask 1043456
  %v388 = vsel %vm386, %v329, 0
  %390 = vmatprep.subr.mxu0 0.0
  %391 = vmatpush1.msra.mxu0 0.0
  %392 = vmatprep.subr.mxu0 0.0
  %393 = vmatpush1.msra.mxu0 0.0
  %394 = vmatprep.subr.mxu0 0.0
  %395 = vmatpush1.msra.mxu0 0.0
  %396 = vmatprep.subr.mxu0 0.0
  %397 = vmatpush1.msra.mxu0 0.0
  %398 = vmatprep.subr.mxu0 0.0
  %399 = vmatpush1.msra.mxu0 0.0
  %400 = vmatprep.subr.mxu0 0.0
  %401 = vmatpush1.msra.mxu0 0.0
  %402 = vmatprep.subr.mxu0 0.0
  %403 = vmatpush1.msra.mxu0 0.0
  %404 = vmatprep.subr.mxu0 0.0
  %405 = vmatpush1.msra.mxu0 0.0
  %406 = vmatprep.subr.mxu0 0.0
  %407 = vmatpush1.msra.mxu0 %v388
  %408 = vmatprep.subr.mxu0 0.0
  %409 = vmatpush1.msra.mxu0 %v328
  %410 = vmatprep.subr.mxu0 0.0
  %411 = vmatpush1.msra.mxu0 %v327
  %412 = vmatprep.subr.mxu0 0.0
  %413 = vmatpush1.msra.mxu0 %v326
  %414 = vmatprep.subr.mxu0 0.0
  %415 = vmatpush1.msra.mxu0 %v325
  %416 = vmatprep.subr.mxu0 0.0
  %417 = vmatpush1.msra.mxu0 %v324
  %418 = vmatprep.subr.mxu0 0.0
  %419 = vmatpush1.msra.mxu0 %v323
  %420 = vmatprep.subr.mxu0 0.0
  %421 = vmatpush1.msra.mxu0 %v322
  %422 = vmatprep.subr.mxu0 0.0
  %423 = vmatpush2.msra.mxu0 0.0
  %424 = vmatprep.subr.mxu0 0.0
  %425 = vmatpush2.msra.mxu0 0.0
  %426 = vmatprep.subr.mxu0 0.0
  %427 = vmatpush2.msra.mxu0 0.0
  %428 = vmatprep.subr.mxu0 0.0
  %429 = vmatpush2.msra.mxu0 0.0
  %430 = vmatprep.subr.mxu0 0.0
  %431 = vmatpush2.msra.mxu0 0.0
  %432 = vmatprep.subr.mxu0 0.0
  %433 = vmatpush2.msra.mxu0 0.0
  %434 = vmatprep.subr.mxu0 0.0
  %435 = vmatpush2.msra.mxu0 0.0
  %436 = vmatprep.subr.mxu0 0.0
  %437 = vmatpush2.msra.mxu0 0.0
  %438 = vmatprep.subr.mxu0 0.0
  %439 = vmatpush2.msra.mxu0 0.0
  %440 = vmatprep.subr.mxu0 0.0
  %441 = vmatpush2.msra.mxu0 0.0
  %442 = vmatprep.subr.mxu0 0.0
  %443 = vmatpush2.msra.mxu0 0.0
  %444 = vmatprep.subr.mxu0 0.0
  %445 = vmatpush2.msra.mxu0 0.0
  %446 = vmatprep.subr.mxu0 0.0
  %447 = vmatpush2.msra.mxu0 0.0
  %448 = vmatprep.subr.mxu0 0.0
  %449 = vmatpush2.msra.mxu0 0.0
  %450 = vmatprep.subr.mxu0 0.0
  %451 = vmatpush2.msra.mxu0 0.0
  %452 = vmatprep.subr.mxu0 0.0
  %453 = vmatpush2.msra.mxu0 0.0
  %454 = vmatprep.mubr.f32.mxu0 0.0
  %455 = vmatmul.mubr.f32.gmra.mxu0 %v339
  %v456 = vpop.f32.mrf.mxu0
  %v457 = vadd.f32 %v335, %v456
  %v458 = vpop.f32.mrf.mxu0
  %459 = vmatprep.mubr.f32.mxu0 0.0
  %460 = vmatmul.mubr.f32.gmra.mxu0 %v342
  %v461 = vpop.f32.mrf.mxu0
  %v462 = vadd.f32 %v335, %v461
  %v463 = vpop.f32.mrf.mxu0
  %464 = vmatprep.mubr.f32.mxu0 0.0
  %465 = vmatmul.mubr.f32.gmra.mxu0 %v345
  %v466 = vpop.f32.mrf.mxu0
  %v467 = vadd.f32 %v335, %v466
  %v468 = vpop.f32.mrf.mxu0
  %469 = vmatprep.mubr.f32.mxu0 0.0
  %470 = vmatmul.mubr.f32.gmra.mxu0 %v348
  %v471 = vpop.f32.mrf.mxu0
  %v472 = vadd.f32 %v335, %v471
  %v473 = vpop.f32.mrf.mxu0
  %474 = vmatprep.mubr.f32.mxu0 0.0
  %475 = vmatmul.mubr.f32.gmra.mxu0 %v351
  %v476 = vpop.f32.mrf.mxu0
  %v477 = vadd.f32 %v335, %v476
  %v478 = vpop.f32.mrf.mxu0
  %479 = vmatprep.mubr.f32.mxu0 0.0
  %480 = vmatmul.mubr.f32.gmra.mxu0 %v354
  %v481 = vpop.f32.mrf.mxu0
  %v482 = vadd.f32 %v335, %v481
  %v483 = vpop.f32.mrf.mxu0
  %484 = vmatprep.mubr.f32.mxu0 0.0
  %485 = vmatmul.mubr.f32.gmra.mxu0 %v357
  %v486 = vpop.f32.mrf.mxu0
  %v487 = vadd.f32 %v335, %v486
  %v488 = vpop.f32.mrf.mxu0
  %489 = vmatprep.mubr.f32.mxu0 0.0
  %490 = vmatmul.mubr.f32.gmra.mxu0 %v360
  %v491 = vpop.f32.mrf.mxu0
  %v492 = vadd.f32 %v335, %v491
  %v493 = vpop.f32.mrf.mxu0
  %494 = vmatprep.mubr.f32.mxu0 0.0
  %495 = vmatmul.mubr.f32.gmra.mxu0 %v363
  %v496 = vpop.f32.mrf.mxu0
  %v497 = vadd.f32 %v335, %v496
  %v498 = vpop.f32.mrf.mxu0
  %499 = vmatprep.mubr.f32.mxu0 0.0
  %500 = vmatmul.mubr.f32.gmra.mxu0 %v366
  %v501 = vpop.f32.mrf.mxu0
  %v502 = vadd.f32 %v335, %v501
  %v503 = vpop.f32.mrf.mxu0
  %504 = vmatprep.mubr.f32.mxu0 0.0
  %505 = vmatmul.mubr.f32.gmra.mxu0 %v369
  %v506 = vpop.f32.mrf.mxu0
  %v507 = vadd.f32 %v335, %v506
  %v508 = vpop.f32.mrf.mxu0
  %509 = vmatprep.mubr.f32.mxu0 0.0
  %510 = vmatmul.mubr.f32.gmra.mxu0 %v372
  %v511 = vpop.f32.mrf.mxu0
  %v512 = vadd.f32 %v335, %v511
  %v513 = vpop.f32.mrf.mxu0
  %514 = vmatprep.mubr.f32.mxu0 0.0
  %515 = vmatmul.mubr.f32.gmra.mxu0 %v375
  %v516 = vpop.f32.mrf.mxu0
  %v517 = vadd.f32 %v335, %v516
  %v518 = vpop.f32.mrf.mxu0
  %519 = vmatprep.mubr.f32.mxu0 0.0
  %520 = vmatmul.mubr.f32.gmra.mxu0 %v378
  %v521 = vpop.f32.mrf.mxu0
  %v522 = vadd.f32 %v335, %v521
  %v523 = vpop.f32.mrf.mxu0
  %524 = vmatprep.mubr.f32.mxu0 0.0
  %525 = vmatmul.mubr.f32.gmra.mxu0 %v381
  %v526 = vpop.f32.mrf.mxu0
  %v527 = vadd.f32 %v335, %v526
  %v528 = vpop.f32.mrf.mxu0
  %529 = vmatprep.mubr.f32.mxu0 0.0
  %530 = vmatmul.mubr.f32.gmra.mxu0 %v384
  %v531 = vpop.f32.mrf.mxu0
  %v532 = vadd.f32 %v335, %v531
  %v533 = vpop.f32.mrf.mxu0
  %534 = vdwg.mxu0
  %vm535 = vcmask 261120
  %536 = vst.msk [vmem:[%s5] sm:$0xff] %vm535, %v457
  %537 = vst.msk [vmem:[%s5 + $0x8] sm:$0xff] %vm535, %v462
  %538 = vst.msk [vmem:[%s5 + $0x10] sm:$0xff] %vm535, %v467
  %539 = vst.msk [vmem:[%s5 + $0x18] sm:$0xff] %vm535, %v472
  %540 = vst.msk [vmem:[%s5 + $0x20] sm:$0xff] %vm535, %v477
  %541 = vst.msk [vmem:[%s5 + $0x28] sm:$0xff] %vm535, %v482
  %542 = vst.msk [vmem:[%s5 + $0x30] sm:$0xff] %vm535, %v487
  %543 = vst.msk [vmem:[%s5 + $0x38] sm:$0xff] %vm535, %v492
  %544 = vst.msk [vmem:[%s5 + $0x40] sm:$0xff] %vm535, %v497
  %545 = vst.msk [vmem:[%s5 + $0x48] sm:$0xff] %vm535, %v502
  %546 = vst.msk [vmem:[%s5 + $0x50] sm:$0xff] %vm535, %v507
  %547 = vst.msk [vmem:[%s5 + $0x58] sm:$0xff] %vm535, %v512
  %548 = vst.msk [vmem:[%s5 + $0x60] sm:$0xff] %vm535, %v517
  %549 = vst.msk [vmem:[%s5 + $0x68] sm:$0xff] %vm535, %v522
  %550 = vst.msk [vmem:[%s5 + $0x70] sm:$0xff] %vm535, %v527
  %551 = vst.msk [vmem:[%s5 + $0x78] sm:$0xff] %vm535, %v532
  // Predicated region
  $region22: #{kan_layer_forward.1} parent=0 // pred_check
    _
  $region23: #{kan_layer_forward.1} parent=0 // pred_check_branch
    %553 = sbr.rel (0) target = $region25
  $region24: #{kan_layer_forward.1} parent=0 // pred_region
    _
  $region25: #{kan_layer_forward.1} parent=0 // pred_fallthru
    _
  // Predicated region
  $region26: #{kan_layer_forward.1} parent=0 // pred_check
    _
  $region27: #{kan_layer_forward.1} parent=0 // pred_check_branch
    %555 = sbr.rel (0) target = $region29
  $region28: #{kan_layer_forward.1} parent=0 // pred_region
    _
  $region29: #{kan_layer_forward.1} parent=0 // pred_fallthru
    _

</llo_original>
